<compile_context>
chip_gen: v6e
topology: v6e:2x2x1
jax: 0.10.0
libtpu: 0.0.40
codegen_flags: <defaults>
</compile_context>

<pallas_src>
import math

import jax
import jax.numpy as jnp
from jax.experimental import pallas as pl
from jax.experimental.pallas import tpu as pltpu


def _linear_kernel(x_ref, wt_ref, b_ref, o_ref):
    # x_ref: (tm, Kp), wt_ref: (Kp, Np) block-diagonal W^T, b_ref: (1, Np)
    acc = jnp.dot(x_ref[...], wt_ref[...], preferred_element_type=jnp.float32)
    o_ref[...] = (acc + b_ref[...]).astype(o_ref.dtype)


def _round_up(x, m):
    return ((x + m - 1) // m) * m


def sketch_embedding(input_states, weight, bias, *, tm_target=4096,
                     out_dtype=None):
    """input_states: (B, S, input_dim); weight: (hidden_dim, input_dim);
    bias: (hidden_dim,). Returns (B, S, hidden_dim) — matches nn.Linear.

    out_dtype: optionally store activations in a narrower dtype (e.g. bf16)
    to halve the dominant output HBM traffic; accumulation stays f32.
    """
    B, S, K = input_states.shape
    N = weight.shape[0]
    M = B * S
    dtype = input_states.dtype
    out_dtype = out_dtype if out_dtype is not None else dtype
    in_itemsize = jnp.dtype(dtype).itemsize
    out_itemsize = jnp.dtype(out_dtype).itemsize

    # --- Row-packing factor: make the output's last dim a multiple of 128. ---
    if N % 128 == 0:
        pack = 1
    else:
        base = 128 // math.gcd(N, 128)       # minimal lane-dense packing
        pack = base if base >= 8 else 8      # boost to 8 for input lane density

    # Pad M up to a multiple of pack (a few zero rows of extra HBM traffic is
    # negligible vs. losing the lane-dense store path).
    M_pad = _round_up(M, pack)
    x2 = input_states.reshape(M, K)          # contiguous -> metadata only
    if M_pad != M:
        x2 = jnp.pad(x2, ((0, M_pad - M), (0, 0)))

    Mp, Kp, Np = M_pad // pack, K * pack, N * pack
    x2d = x2.reshape(Mp, Kp)                 # contiguous -> metadata only

    # Block-diagonal expanded weight (tiny constant, e.g. 40x256 f32).
    # Note: weight is cast to the activation dtype before the matmul (differs
    # slightly from an f32-weight mixed-precision Linear if inputs are bf16).
    wt = weight.astype(dtype).T              # (K, N)
    if pack > 1:
        wt = jnp.kron(jnp.eye(pack, dtype=dtype), wt)          # (Kp, Np)
        b2d = jnp.tile(bias.astype(jnp.float32), (pack,)).reshape(1, Np)
    else:
        b2d = bias.astype(jnp.float32).reshape(1, Np)

    # --- Row-tile size selection (VMEM-budgeted, mem-bound regime). ---
    SUB = 16  # sublane multiple that is safe for both f32 (8) and bf16 (16)
    kp_lanes = _round_up(Kp, 128)            # input tile is lane-padded in VMEM
    per_row_pipe = 2 * (kp_lanes * in_itemsize + Np * out_itemsize)  # dbl-buf
    per_row_tmp = 2 * Np * 4                 # f32 dot/add temporaries
    per_row = per_row_pipe + per_row_tmp
    TILE_VMEM_BUDGET = 28 * 1024 * 1024
    tm_vmem_cap = max(SUB, (TILE_VMEM_BUDGET // per_row) // SUB * SUB)

    if Mp <= SUB:
        tm = Mp                              # full-extent block (any size ok)
    else:
        tm = max(SUB, (min(tm_target, tm_vmem_cap) // SUB) * SUB)
        # v7x megacore: guarantee >= 2 grid steps so both TensorCores get work.
        if pl.cdiv(Mp, tm) < 2:
            tm = max(SUB, _round_up(pl.cdiv(Mp, 2), SUB))
    grid = (pl.cdiv(Mp, tm),)

    # Explicit scoped-VMEM limit (raises v5e's 16 MiB default; <= physical on
    # all of v5e/v6e/v7x).
    weight_bytes = _round_up(Kp, 8) * Np * in_itemsize + Np * 4
    needed = tm * per_row + 2 * weight_bytes + 2 * 1024 * 1024
    vmem_limit = min(56 * 1024 * 1024,
                     max(32 * 1024 * 1024, _round_up(needed, 1024 * 1024)))

    # Advisory only (logical flops/bytes; ignores lane padding / block-diag).
    cost = pl.CostEstimate(
        flops=2 * M * K * N,
        transcendentals=0,
        bytes_accessed=(M * K * in_itemsize + M * N * out_itemsize
                        + Kp * Np * in_itemsize + Np * 4),
    )

    out2d = pl.pallas_call(
        _linear_kernel,
        out_shape=jax.ShapeDtypeStruct((Mp, Np), out_dtype),
        grid=grid,
        in_specs=[
            pl.BlockSpec((tm, Kp), lambda i: (i, 0)),   # streamed row tiles
            pl.BlockSpec((Kp, Np), lambda i: (0, 0)),   # VMEM-resident weight
            pl.BlockSpec((1, Np), lambda i: (0, 0)),    # VMEM-resident bias
        ],
        out_specs=pl.BlockSpec((tm, Np), lambda i: (i, 0)),
        compiler_params=pltpu.CompilerParams(
            dimension_semantics=("parallel",),
            vmem_limit_bytes=vmem_limit),
        cost_estimate=cost,
    )(x2d, wt, b2d)

    # Unpack: (Mp, Np) -> (M_pad, N) is a contiguous row-major reshape because
    # packed-row j's output occupies lanes [j*N, (j+1)*N).
    out = out2d.reshape(M_pad, N)
    if M_pad != M:
        out = out[:M]
    return out.reshape(B, S, N)


if __name__ == "__main__":
    # Small deterministic setup consistent with the module: sketch tokens are
    # 5-dim (dx, dy, pen states), hidden_dim=32.
    input_dim, hidden_dim = 5, 32

    key = jax.random.PRNGKey(0)
    k_w, k_b, k_x1, k_x2, k_x3 = jax.random.split(key, 5)

    # Deterministic init mimicking nn.Linear's uniform(-1/sqrt(K), 1/sqrt(K)).
    bound = 1.0 / math.sqrt(input_dim)
    weight = jax.random.uniform(
        k_w, (hidden_dim, input_dim), minval=-bound, maxval=bound,
        dtype=jnp.float32)
    bias = jax.random.uniform(
        k_b, (hidden_dim,), minval=-bound, maxval=bound, dtype=jnp.float32)

    def check(x):
        out = jax.block_until_ready(sketch_embedding(x, weight, bias))
        ref = x @ weight.T + bias
        assert out.shape == ref.shape
        assert jnp.allclose(out, ref, atol=1e-5, rtol=1e-5), (
            float(jnp.abs(out - ref).max()))

    # Main small case (batch=2, seq=8).
    check(jax.random.normal(k_x1, (2, 8, input_dim), dtype=jnp.float32))
    # Ragged M (exercises the pad-to-pack path).
    check(jax.random.normal(k_x2, (3, 7, input_dim), dtype=jnp.float32))
    # Larger M (exercises the multi-step parallel grid + ragged last tile).
    check(jax.random.normal(k_x3, (4, 96, input_dim), dtype=jnp.float32))

    print("KERNEL_OK")
</pallas_src>

<mosaic_0001>
module attributes {stable_mosaic.version = 11 : i64} {
  func.func @_linear_kernel(%arg0: i32, %arg1: memref<2x40xf32, #tpu.memory_space<vmem>>, %arg2: memref<40x256xf32, #tpu.memory_space<vmem>>, %arg3: memref<1x256xf32, #tpu.memory_space<vmem>>, %arg4: memref<2x256xf32, #tpu.memory_space<vmem>>) attributes {dimension_semantics = [#tpu.dimension_semantics<parallel>], iteration_bounds = array<i64: 1>, scalar_prefetch = 0 : i64, scratch_operands = 0 : i64, tpu.core_type = #tpu.core_type<tc>, window_params = [{transform_indices = @transform_0, window_bounds = array<i64: 2, 40>}, {pipeline_mode = #tpu.pipeline_mode<synchronous>, transform_indices = @transform_1, window_bounds = array<i64: 40, 256>}, {pipeline_mode = #tpu.pipeline_mode<synchronous>, transform_indices = @transform_2, window_bounds = array<i64: 1, 256>}, {transform_indices = @transform_3, window_bounds = array<i64: 2, 256>}]} {
    %c0 = arith.constant 0 : index
    %c0_0 = arith.constant 0 : index
    %0 = vector.load %arg1[%c0, %c0_0] : memref<2x40xf32, #tpu.memory_space<vmem>>, vector<2x40xf32>
    %c0_1 = arith.constant 0 : index
    %c0_2 = arith.constant 0 : index
    %1 = vector.load %arg2[%c0_1, %c0_2] : memref<40x256xf32, #tpu.memory_space<vmem>>, vector<40x256xf32>
    %cst = arith.constant dense<0.000000e+00> : vector<2x256xf32>
    %2 = tpu.matmul %0, %1, %cst {dimension_numbers = #tpu.dot_dimension_numbers<[1], [0], [0], [1], [0, 0, 1, 1], [], []>} : vector<2x40xf32>, vector<40x256xf32>, vector<2x256xf32> -> vector<2x256xf32>
    %c0_3 = arith.constant 0 : index
    %c0_4 = arith.constant 0 : index
    %3 = vector.load %arg3[%c0_3, %c0_4] : memref<1x256xf32, #tpu.memory_space<vmem>>, vector<1x256xf32>
    %4 = vector.broadcast %3 : vector<1x256xf32> to vector<2x256xf32>
    %5 = arith.addf %2, %4 : vector<2x256xf32>
    %c0_5 = arith.constant 0 : index
    %c0_6 = arith.constant 0 : index
    %6 = vector.load %arg4[%c0_5, %c0_6] : memref<2x256xf32, #tpu.memory_space<vmem>>, vector<2x256xf32>
    tpu.vector_store %arg4[%c0_5, %c0_6], %5 {strides = array<i32>} : memref<2x256xf32, #tpu.memory_space<vmem>>, vector<2x256xf32>,
    return
  }
  func.func @transform_0(%arg0: i32) -> (i32, i32) {
    %c0_i32 = arith.constant 0 : i32
    %c0_i32_0 = arith.constant 0 : i32
    return %arg0, %c0_i32 : i32, i32
  }
  func.func @transform_1(%arg0: i32) -> (i32, i32) {
    %c0_i32 = arith.constant 0 : i32
    %c0_i32_0 = arith.constant 0 : i32
    %c0_i32_1 = arith.constant 0 : i32
    return %c0_i32, %c0_i32_0 : i32, i32
  }
  func.func @transform_2(%arg0: i32) -> (i32, i32) {
    %c0_i32 = arith.constant 0 : i32
    %c0_i32_0 = arith.constant 0 : i32
    %c0_i32_1 = arith.constant 0 : i32
    return %c0_i32, %c0_i32_0 : i32, i32
  }
  func.func @transform_3(%arg0: i32) -> (i32, i32) {
    %c0_i32 = arith.constant 0 : i32
    %c0_i32_0 = arith.constant 0 : i32
    return %arg0, %c0_i32 : i32, i32
  }
}

</mosaic_0001>

<llo_original>
// kernel: tpu_custom_call.1
$region0: #{tpu_custom_call.1}
  #allocation0 [shape = 'u32[]', space=smem, size = 0x4, offset = 0x4, fixed_abs, tag = 'smem constant byte address 0x4 - core index']
  #allocation1 [shape = 'u32[144,128]{1,0:T(1,128)}', space=vmem, size = 0x12000, scoped, tag = 'internal scratch']
  %s0 = inlined_call_operand.hbm [shape: f32[2,40], index: 0, kind: input, shape index: {}]
  %s1 = inlined_call_operand.hbm [shape: f32[40,256], index: 1, kind: input, shape index: {}]
  %s2 = inlined_call_operand.vmem [shape: f32[1,256], index: 2, kind: input, shape index: {}]
  %s3 = inlined_call_operand.hbm [shape: f32[2,256], index: 3, kind: output, shape index: {}]
  %s4 = sld [smem:[#allocation0]]
  $region30: #{tpu_custom_call.1} parent=0
    _
  %s6 = ssub.s32 1, %s4
  %s7 = scalar_select 0, %s6, %s4
  $region1: #{tpu_custom_call.1} parent=0
    #allocation2 [shape = 'u8[1024]{0}', space=vmem, size = 0x400, scoped, tag = 'input window, operand 0, single buffered']
    #allocation3 [shape = 's32[1]{0}', space=sflag, size = 0x4, scoped, tag = 'scoped memory for tpu_custom_call.1']
    #allocation4 [shape = 's32[1]{0}', space=sflag, size = 0x4, scoped, tag = 'scoped memory for tpu_custom_call.1']
    #allocation5 [shape = 'u8[40960]{0}', space=vmem, size = 0xa000, scoped, tag = 'input window, operand 1, single buffered']
    #allocation6 [shape = 's32[1]{0}', space=sflag, size = 0x4, scoped, tag = 'scoped memory for tpu_custom_call.1']
    #allocation7 [shape = 'u8[2048]{0}', space=vmem, size = 0x800, scoped, tag = 'output window, operand 0, single buffered']
    %8 = vsyncpa [#allocation3], 0
    %9 = vsyncpa [#allocation6], 0
    %10 = vsyncpa [#allocation4], 0
    // Predicated region
    $region2: #{tpu_custom_call.1} parent=1 // pred_check
      _
    $region3: #{tpu_custom_call.1} parent=1 // pred_check_branch
      %12 = sbr.rel (0) target = $region5
    $region4: #{tpu_custom_call.1} parent=1 // pred_region
      %s14 = ssub.s32 32, 32
      %15 = vsyncadd [#allocation3], %s14
      %s17 = sshll.u32 [#allocation2], 4
      %s18 = int_to_ptr.vmem [resolvable:$true] %s17
      %20 = dma.hbm_to_vmem [thread:$0]  %s0, 32, %s18, [#allocation3]
    $region5: #{tpu_custom_call.1} parent=1 // pred_fallthru
      _
    // Predicated region
    $region6: #{tpu_custom_call.1} parent=1 // pred_check
      _
    $region7: #{tpu_custom_call.1} parent=1 // pred_check_branch
      %22 = sbr.rel (0) target = $region9
    $region8: #{tpu_custom_call.1} parent=1 // pred_region
      %s24 = ssub.s32 1280, 1280
      %25 = vsyncadd [#allocation6], %s24
      %s26 = sshll.u32 [#allocation5], 4
      %s27 = int_to_ptr.vmem [resolvable:$true] %s26
      %32 = dma.hbm_to_vmem [thread:$0]  %s1, 1280, %s27, [#allocation6], 256, 256, 16
    $region9: #{tpu_custom_call.1} parent=1 // pred_fallthru
      _
    // Predicated region
    $region10: #{tpu_custom_call.1} parent=1 // pred_check
      _
    $region11: #{tpu_custom_call.1} parent=1 // pred_check_branch
      %34 = sbr.rel (0) target = $region13
    $region12: #{tpu_custom_call.1} parent=1 // pred_region
      _
    $region13: #{tpu_custom_call.1} parent=1 // pred_fallthru
      _
    // Predicated region
    $region14: #{tpu_custom_call.1} parent=1 // pred_check
      _
    $region15: #{tpu_custom_call.1} parent=1 // pred_check_branch
      %36 = sbr.rel (0) target = $region17
    $region16: #{tpu_custom_call.1} parent=1 // pred_region
      %37 = dma.done [#allocation3], 32
    $region17: #{tpu_custom_call.1} parent=1 // pred_fallthru
      _
    // Predicated region
    $region18: #{tpu_custom_call.1} parent=1 // pred_check
      _
    $region19: #{tpu_custom_call.1} parent=1 // pred_check_branch
      %39 = sbr.rel (0) target = $region21
    $region20: #{tpu_custom_call.1} parent=1 // pred_region
      %40 = dma.done [#allocation6], 1280
    $region21: #{tpu_custom_call.1} parent=1 // pred_fallthru
      _
    %v41 = vld [vmem:[#allocation2] sm:$0x3]
    %v42 = vld [vmem:[#allocation5] sm:$0xff]
    %v43 = vld [vmem:[#allocation5 + $0x8] sm:$0xff]
    %v44 = vld [vmem:[#allocation5 + $0x10] sm:$0xff]
    %v45 = vld [vmem:[#allocation5 + $0x18] sm:$0xff]
    %v46 = vld [vmem:[#allocation5 + $0x20] sm:$0xff]
    %v47 = vld [vmem:[#allocation5 + $0x28] sm:$0xff]
    %v48 = vld [vmem:[#allocation5 + $0x30] sm:$0xff]
    %v49 = vld [vmem:[#allocation5 + $0x38] sm:$0xff]
    %v50 = vld [vmem:[#allocation5 + $0x40] sm:$0xff]
    %v51 = vld [vmem:[#allocation5 + $0x48] sm:$0xff]
    %v52 = vld [vmem:[%s2] sm:$0x3]
    %v54 = vlaneseq
    %v55 = vshrl.u32 %v54, 7
    %v56 = vsub.s32 0, %v55
    %v57 = vrot.slane %v52, %v56
    %v58 = vlaneseq
    %v59 = vshrl.u32 %v58, 7
    %v60 = vsub.s32 1, %v59
    %v61 = vrot.slane %v52, %v60
    %vm64 = vcmask 326656
    %v66 = vsel %vm64, %v41, 0
    %68 = vmatprep.subr.mxu0 0.0
    %69 = vmatpush1.msra.mxu0 0.0
    %70 = vmatprep.subr.mxu0 0.0
    %71 = vmatpush1.msra.mxu0 0.0
    %72 = vmatprep.subr.mxu0 0.0
    %73 = vmatpush1.msra.mxu0 0.0
    %74 = vmatprep.subr.mxu0 0.0
    %75 = vmatpush1.msra.mxu0 0.0
    %76 = vmatprep.subr.mxu0 0.0
    %77 = vmatpush1.msra.mxu0 0.0
    %78 = vmatprep.subr.mxu0 0.0
    %79 = vmatpush1.msra.mxu0 0.0
    %80 = vmatprep.subr.mxu0 0.0
    %81 = vmatpush1.msra.mxu0 0.0
    %82 = vmatprep.subr.mxu0 0.0
    %83 = vmatpush1.msra.mxu0 0.0
    %84 = vmatprep.subr.mxu0 0.0
    %85 = vmatpush1.msra.mxu0 0.0
    %86 = vmatprep.subr.mxu0 0.0
    %87 = vmatpush1.msra.mxu0 0.0
    %88 = vmatprep.subr.mxu0 0.0
    %89 = vmatpush1.msra.mxu0 0.0
    %90 = vmatprep.subr.mxu0 %v51
    %91 = vmatpush1.msra.mxu0 %v50
    %92 = vmatprep.subr.mxu0 %v49
    %93 = vmatpush1.msra.mxu0 %v48
    %94 = vmatprep.subr.mxu0 %v47
    %95 = vmatpush1.msra.mxu0 %v46
    %96 = vmatprep.subr.mxu0 %v45
    %97 = vmatpush1.msra.mxu0 %v44
    %98 = vmatprep.subr.mxu0 %v43
    %99 = vmatpush1.msra.mxu0 %v42
    %100 = vmatprep.subr.mxu0 0.0
    %101 = vmatpush2.msra.mxu0 0.0
    %102 = vmatprep.subr.mxu0 0.0
    %103 = vmatpush2.msra.mxu0 0.0
    %104 = vmatprep.subr.mxu0 0.0
    %105 = vmatpush2.msra.mxu0 0.0
    %106 = vmatprep.subr.mxu0 0.0
    %107 = vmatpush2.msra.mxu0 0.0
    %108 = vmatprep.subr.mxu0 0.0
    %109 = vmatpush2.msra.mxu0 0.0
    %110 = vmatprep.subr.mxu0 0.0
    %111 = vmatpush2.msra.mxu0 0.0
    %112 = vmatprep.subr.mxu0 0.0
    %113 = vmatpush2.msra.mxu0 0.0
    %114 = vmatprep.subr.mxu0 0.0
    %115 = vmatpush2.msra.mxu0 0.0
    %116 = vmatprep.subr.mxu0 0.0
    %117 = vmatpush2.msra.mxu0 0.0
    %118 = vmatprep.subr.mxu0 0.0
    %119 = vmatpush2.msra.mxu0 0.0
    %120 = vmatprep.subr.mxu0 0.0
    %121 = vmatpush2.msra.mxu0 0.0
    %122 = vmatprep.subr.mxu0 0.0
    %123 = vmatpush2.msra.mxu0 0.0
    %124 = vmatprep.subr.mxu0 0.0
    %125 = vmatpush2.msra.mxu0 0.0
    %126 = vmatprep.subr.mxu0 0.0
    %127 = vmatpush2.msra.mxu0 0.0
    %128 = vmatprep.subr.mxu0 0.0
    %129 = vmatpush2.msra.mxu0 0.0
    %130 = vmatprep.subr.mxu0 0.0
    %131 = vmatpush2.msra.mxu0 0.0
    %132 = vmatprep.mubr.f32.mxu0 0.0
    %133 = vmatmul.mubr.f32.gmra.mxu0 %v66
    %v134 = vpop.f32.mrf.mxu0
    %v135 = vadd.f32 %v57, %v134
    %v136 = vpop.f32.mrf.mxu0
    %v137 = vadd.f32 %v61, %v136
    %138 = vdwg.mxu0
    %v141 = vcombine.low %v135, %v137
    %v143 = vunpack.c.l.s4 1983009808
    %v144 = vunpack.c.0.s8 %v143
    %v145 = vlaneseq
    %v146 = vshrl.u32 %v145, 7
    %v147 = vsub.s32 %v144, %v146
    %v148 = vrot.slane %v141, %v147
    %150 = vst [vmem:[#allocation7] sm:$0xf] %v148
    // Predicated region
    $region22: #{tpu_custom_call.1} parent=1 // pred_check
      _
    $region23: #{tpu_custom_call.1} parent=1 // pred_check_branch
      %152 = sbr.rel (0) target = $region25
    $region24: #{tpu_custom_call.1} parent=1 // pred_region
      %s154 = ssub.s32 64, 64
      %155 = vsyncadd [#allocation4], %s154
      %s157 = sshll.u32 [#allocation7], 4
      %s158 = int_to_ptr.vmem [resolvable:$true] %s157
      %160 = dma.vmem_to_hbm [thread:$0]  %s158, 64, %s3, [#allocation4]
    $region25: #{tpu_custom_call.1} parent=1 // pred_fallthru
      _
    // Predicated region
    $region26: #{tpu_custom_call.1} parent=1 // pred_check
      _
    $region27: #{tpu_custom_call.1} parent=1 // pred_check_branch
      %162 = sbr.rel (0) target = $region29
    $region28: #{tpu_custom_call.1} parent=1 // pred_region
      %163 = dma.done [#allocation4], 64
    $region29: #{tpu_custom_call.1} parent=1 // pred_fallthru
      _
    %164 = vsyncpa [#allocation3], 1
    %165 = vsyncpa [#allocation6], 1
    %166 = vsyncpa [#allocation4], 1

</llo_original>
